<compile_context>
chip_gen: v7x
topology: tpu7x:2x2x1
jax: 0.10.0
libtpu: 0.0.40
codegen_flags: <defaults>
</compile_context>

<pallas_src>
import functools
import math

import jax
import jax.numpy as jnp
from jax import lax
from jax.experimental import pallas as pl
from jax.experimental.pallas import tpu as pltpu


def _dwconv_kernel(x_ref, w_ref, b_ref, col_ref, o_ref, *, W: int):
    # x_ref:   (1, N, TC)  input block, native dtype (N = H*W, TC = channel tile)
    # w_ref:   (9, TC)     depthwise taps, row k = (dy, dx) = (k // 3, k % 3)
    # b_ref:   (1, TC)     bias
    # col_ref: (N, 1)      int32 column index (n mod W), precomputed in the wrapper
    # o_ref:   (1, N, TC)  output block
    N = x_ref.shape[1]
    xc = x_ref[0]                                      # (N, TC), native dtype

    col = col_ref[...]                                 # (N, 1) int32: w coordinate
    row = lax.broadcasted_iota(jnp.int32, (N, 1), 0)   # flat spatial index n

    zero_in = jnp.zeros((), xc.dtype)
    # Left/right neighbours along W (sublane axis) via XLU rolls; zero the wrapped column.
    xl = jnp.where(col == 0, zero_in, pltpu.roll(xc, 1, axis=0))          # x[h, w-1]
    xr = jnp.where(col == W - 1, zero_in, pltpu.roll(xc, N - 1, axis=0))  # x[h, w+1]

    # Hoisted tap / bias casts (once per block).
    w = w_ref[...].astype(jnp.float32)                 # (9, TC)
    b = b_ref[0].astype(jnp.float32)                   # (TC,)

    xl_f = xl.astype(jnp.float32)
    xc_f = xc.astype(jnp.float32)
    xr_f = xr.astype(jnp.float32)

    def row_conv(dy):
        # 3-tap conv along W for input row (h + dy - 1), still indexed at its own row.
        return xl_f * w[3 * dy + 0] + xc_f * w[3 * dy + 1] + xr_f * w[3 * dy + 2]

    y0 = row_conv(0)   # must be taken from the row above
    y1 = row_conv(1)   # same row
    y2 = row_conv(2)   # must be taken from the row below

    zero_f = jnp.zeros((), jnp.float32)
    # Whole-image-row shifts (W flat positions) via rolls; zero the first / last image row.
    yu = jnp.where(row < W, zero_f, pltpu.roll(y0, W, axis=0))            # y0[n - W]
    yd = jnp.where(row >= N - W, zero_f, pltpu.roll(y2, N - W, axis=0))   # y2[n + W]

    o_ref[0] = (y1 + yu + yd + b).astype(o_ref.dtype)


def dwconv_pallas(x, weight, bias):
    """Depthwise 3x3 conv matching PyTorch DWConv.forward.

    x:      (B, N, C), N a perfect square (N = H*W)
    weight: (C, 1, 3, 3)  -- PyTorch nn.Conv2d(dim, dim, 3, groups=dim) layout
    bias:   (C,)
    """
    B, N, C = x.shape
    H = W = int(math.sqrt(N))
    assert H * W == N, "N must be a perfect square"
    assert weight.shape == (C, 1, 3, 3), "expected PyTorch depthwise weight (C, 1, 3, 3)"
    assert bias.shape == (C,)

    # (C,1,3,3) -> (3,3,C) -> (9,C); tiny one-off transform in plain JAX.
    w9 = jnp.transpose(weight[:, 0, :, :], (1, 2, 0)).reshape(9, C)
    b2 = bias.reshape(1, C)
    col = (jnp.arange(N, dtype=jnp.int32) % W).reshape(N, 1)

    # Lane-dense channel tiles when possible (C multiple of 128), else a single full-C tile.
    TC = 128 if C % 128 == 0 else C
    n_c = C // TC

    # Rough VMEM budget: double-buffered in/out blocks + f32 temporaries; clamp so the
    # request stays well inside v7x's 64 MiB physical VMEM (v5e/v6e have 128 MiB).
    block_bytes = N * TC * x.dtype.itemsize
    vmem_limit = int(min(48 * 1024 * 1024, max(16 * 1024 * 1024, 12 * block_bytes)))

    kernel = functools.partial(_dwconv_kernel, W=W)

    out = pl.pallas_call(
        kernel,
        out_shape=jax.ShapeDtypeStruct((B, N, C), x.dtype),
        grid_spec=pltpu.PrefetchScalarGridSpec(
            num_scalar_prefetch=0,
            grid=(B, n_c),
            in_specs=[
                pl.BlockSpec((1, N, TC), lambda b, c: (b, 0, c)),
                pl.BlockSpec((9, TC), lambda b, c: (0, c)),
                pl.BlockSpec((1, TC), lambda b, c: (0, c)),
                pl.BlockSpec((N, 1), lambda b, c: (0, 0)),
            ],
            out_specs=pl.BlockSpec((1, N, TC), lambda b, c: (b, 0, c)),
        ),
        compiler_params=pltpu.CompilerParams(
            dimension_semantics=("parallel", "parallel"),
            vmem_limit_bytes=vmem_limit,
        ),
    )(x, w9, b2, col)

    return out


def dwconv_reference(x, weight, bias):
    """Pure-JAX reference: depthwise conv via lax.conv_general_dilated (torch weight layout)."""
    B, N, C = x.shape
    H = W = int(math.sqrt(N))
    x_img = x.reshape(B, H, W, C)
    kern = jnp.transpose(weight[:, 0, :, :], (1, 2, 0)).reshape(3, 3, 1, C)  # HWIO, I=1
    y = lax.conv_general_dilated(
        x_img, kern, window_strides=(1, 1), padding=((1, 1), (1, 1)),
        dimension_numbers=("NHWC", "HWIO", "NHWC"), feature_group_count=C)
    y = y + bias[None, None, None, :]
    return y.reshape(B, N, C)


if __name__ == "__main__":
    key = jax.random.PRNGKey(0)
    B, H, W, C = 2, 8, 8, 256     # dim=256 -> two lane-dense 128-channel tiles
    N = H * W

    kx, kw, kb = jax.random.split(key, 3)
    x = jax.random.normal(kx, (B, N, C), dtype=jnp.float32)
    # nn.Conv2d(dim, dim, 3, groups=dim) weight layout: (C, 1, 3, 3)
    weight = jax.random.normal(kw, (C, 1, 3, 3), dtype=jnp.float32) * 0.1
    bias = jax.random.normal(kb, (C,), dtype=jnp.float32) * 0.1

    out = jax.block_until_ready(dwconv_pallas(x, weight, bias))
    ref = jax.block_until_ready(dwconv_reference(x, weight, bias))

    if not jnp.allclose(out, ref, atol=1e-5, rtol=1e-5):
        raise AssertionError("Pallas DWConv does not match reference")

    print("KERNEL_OK")
</pallas_src>

<mosaic_0001>
module attributes {stable_mosaic.version = 11 : i64} {
  func.func @_dwconv_kernel(%arg0: i32, %arg1: i32, %arg2: memref<1x64x128xf32, #tpu.memory_space<vmem>>, %arg3: memref<9x128xf32, #tpu.memory_space<vmem>>, %arg4: memref<1x128xf32, #tpu.memory_space<vmem>>, %arg5: memref<64x1xi32, #tpu.memory_space<vmem>>, %arg6: memref<1x64x128xf32, #tpu.memory_space<vmem>>) attributes {dimension_semantics = [#tpu.dimension_semantics<parallel>, #tpu.dimension_semantics<parallel>], iteration_bounds = array<i64: 2, 2>, scalar_prefetch = 0 : i64, scratch_operands = 0 : i64, tpu.core_type = #tpu.core_type<tc>, window_params = [{transform_indices = @transform_0, window_bounds = array<i64: 1, 64, 128>}, {transform_indices = @transform_1, window_bounds = array<i64: 9, 128>}, {transform_indices = @transform_2, window_bounds = array<i64: 1, 128>}, {pipeline_mode = #tpu.pipeline_mode<synchronous>, transform_indices = @transform_3, window_bounds = array<i64: 64, 1>}, {transform_indices = @transform_4, window_bounds = array<i64: 1, 64, 128>}]} {
    %c0 = arith.constant 0 : index
    %c0_0 = arith.constant 0 : index
    %c0_1 = arith.constant 0 : index
    %0 = vector.load %arg2[%c0, %c0_0, %c0_1] : memref<1x64x128xf32, #tpu.memory_space<vmem>>, vector<1x64x128xf32>
    %1 = vector.shape_cast %0 : vector<1x64x128xf32> to vector<64x128xf32>
    %c0_2 = arith.constant 0 : index
    %c0_3 = arith.constant 0 : index
    %2 = vector.load %arg5[%c0_2, %c0_3] : memref<64x1xi32, #tpu.memory_space<vmem>>, vector<64x1xi32>
    %3 = tpu.iota {dimensions = array<i32: 0>} : vector<64x1xi32>
    %c0_i32 = arith.constant 0 : i32
    %4 = vector.broadcast %c0_i32 : i32 to vector<64x1xi32>
    %5 = arith.cmpi eq, %2, %4 : vector<64x1xi32>
    %c1_i32 = arith.constant 1 : i32
    %6 = tpu.dynamic_rotate %1 by %c1_i32 dim 0 : vector<64x128xf32>, i32 -> vector<64x128xf32>
    %cst = arith.constant 0.000000e+00 : f32
    %7 = vector.shape_cast %5 : vector<64x1xi1> to vector<64x1xi1>
    %8 = vector.broadcast %7 : vector<64x1xi1> to vector<64x128xi1>
    %9 = vector.broadcast %cst : f32 to vector<64x128xf32>
    %10 = arith.select %8, %9, %6 : vector<64x128xi1>, vector<64x128xf32>
    %c7_i32 = arith.constant 7 : i32
    %11 = vector.broadcast %c7_i32 : i32 to vector<64x1xi32>
    %12 = arith.cmpi eq, %2, %11 : vector<64x1xi32>
    %c63_i32 = arith.constant 63 : i32
    %13 = tpu.dynamic_rotate %1 by %c63_i32 dim 0 : vector<64x128xf32>, i32 -> vector<64x128xf32>
    %cst_4 = arith.constant 0.000000e+00 : f32
    %14 = vector.shape_cast %12 : vector<64x1xi1> to vector<64x1xi1>
    %15 = vector.broadcast %14 : vector<64x1xi1> to vector<64x128xi1>
    %16 = vector.broadcast %cst_4 : f32 to vector<64x128xf32>
    %17 = arith.select %15, %16, %13 : vector<64x128xi1>, vector<64x128xf32>
    %c0_5 = arith.constant 0 : index
    %c0_6 = arith.constant 0 : index
    %18 = vector.load %arg3[%c0_5, %c0_6] : memref<9x128xf32, #tpu.memory_space<vmem>>, vector<9x128xf32>
    %c0_7 = arith.constant 0 : index
    %c0_8 = arith.constant 0 : index
    %19 = vector.load %arg4[%c0_7, %c0_8] : memref<1x128xf32, #tpu.memory_space<vmem>>, vector<1x128xf32>
    %20 = vector.shape_cast %19 : vector<1x128xf32> to vector<128xf32>
    %21 = vector.extract_strided_slice %18 {offsets = [0, 0], sizes = [1, 128], strides = [1, 1]} : vector<9x128xf32> to vector<1x128xf32>
    %22 = vector.shape_cast %21 : vector<1x128xf32> to vector<128xf32>
    %23 = vector.shape_cast %22 : vector<128xf32> to vector<1x128xf32>
    %24 = vector.broadcast %23 : vector<1x128xf32> to vector<64x128xf32>
    %25 = arith.mulf %10, %24 : vector<64x128xf32>
    %26 = vector.extract_strided_slice %18 {offsets = [1, 0], sizes = [1, 128], strides = [1, 1]} : vector<9x128xf32> to vector<1x128xf32>
    %27 = vector.shape_cast %26 : vector<1x128xf32> to vector<128xf32>
    %28 = vector.shape_cast %27 : vector<128xf32> to vector<1x128xf32>
    %29 = vector.broadcast %28 : vector<1x128xf32> to vector<64x128xf32>
    %30 = arith.mulf %1, %29 : vector<64x128xf32>
    %31 = arith.addf %25, %30 : vector<64x128xf32>
    %32 = vector.extract_strided_slice %18 {offsets = [2, 0], sizes = [1, 128], strides = [1, 1]} : vector<9x128xf32> to vector<1x128xf32>
    %33 = vector.shape_cast %32 : vector<1x128xf32> to vector<128xf32>
    %34 = vector.shape_cast %33 : vector<128xf32> to vector<1x128xf32>
    %35 = vector.broadcast %34 : vector<1x128xf32> to vector<64x128xf32>
    %36 = arith.mulf %17, %35 : vector<64x128xf32>
    %37 = arith.addf %31, %36 : vector<64x128xf32>
    %38 = vector.extract_strided_slice %18 {offsets = [3, 0], sizes = [1, 128], strides = [1, 1]} : vector<9x128xf32> to vector<1x128xf32>
    %39 = vector.shape_cast %38 : vector<1x128xf32> to vector<128xf32>
    %40 = vector.shape_cast %39 : vector<128xf32> to vector<1x128xf32>
    %41 = vector.broadcast %40 : vector<1x128xf32> to vector<64x128xf32>
    %42 = arith.mulf %10, %41 : vector<64x128xf32>
    %43 = vector.extract_strided_slice %18 {offsets = [4, 0], sizes = [1, 128], strides = [1, 1]} : vector<9x128xf32> to vector<1x128xf32>
    %44 = vector.shape_cast %43 : vector<1x128xf32> to vector<128xf32>
    %45 = vector.shape_cast %44 : vector<128xf32> to vector<1x128xf32>
    %46 = vector.broadcast %45 : vector<1x128xf32> to vector<64x128xf32>
    %47 = arith.mulf %1, %46 : vector<64x128xf32>
    %48 = arith.addf %42, %47 : vector<64x128xf32>
    %49 = vector.extract_strided_slice %18 {offsets = [5, 0], sizes = [1, 128], strides = [1, 1]} : vector<9x128xf32> to vector<1x128xf32>
    %50 = vector.shape_cast %49 : vector<1x128xf32> to vector<128xf32>
    %51 = vector.shape_cast %50 : vector<128xf32> to vector<1x128xf32>
    %52 = vector.broadcast %51 : vector<1x128xf32> to vector<64x128xf32>
    %53 = arith.mulf %17, %52 : vector<64x128xf32>
    %54 = arith.addf %48, %53 : vector<64x128xf32>
    %55 = vector.extract_strided_slice %18 {offsets = [6, 0], sizes = [1, 128], strides = [1, 1]} : vector<9x128xf32> to vector<1x128xf32>
    %56 = vector.shape_cast %55 : vector<1x128xf32> to vector<128xf32>
    %57 = vector.shape_cast %56 : vector<128xf32> to vector<1x128xf32>
    %58 = vector.broadcast %57 : vector<1x128xf32> to vector<64x128xf32>
    %59 = arith.mulf %10, %58 : vector<64x128xf32>
    %60 = vector.extract_strided_slice %18 {offsets = [7, 0], sizes = [1, 128], strides = [1, 1]} : vector<9x128xf32> to vector<1x128xf32>
    %61 = vector.shape_cast %60 : vector<1x128xf32> to vector<128xf32>
    %62 = vector.shape_cast %61 : vector<128xf32> to vector<1x128xf32>
    %63 = vector.broadcast %62 : vector<1x128xf32> to vector<64x128xf32>
    %64 = arith.mulf %1, %63 : vector<64x128xf32>
    %65 = arith.addf %59, %64 : vector<64x128xf32>
    %66 = vector.extract_strided_slice %18 {offsets = [8, 0], sizes = [1, 128], strides = [1, 1]} : vector<9x128xf32> to vector<1x128xf32>
    %67 = vector.shape_cast %66 : vector<1x128xf32> to vector<128xf32>
    %68 = vector.shape_cast %67 : vector<128xf32> to vector<1x128xf32>
    %69 = vector.broadcast %68 : vector<1x128xf32> to vector<64x128xf32>
    %70 = arith.mulf %17, %69 : vector<64x128xf32>
    %71 = arith.addf %65, %70 : vector<64x128xf32>
    %c8_i32 = arith.constant 8 : i32
    %72 = vector.broadcast %c8_i32 : i32 to vector<64x1xi32>
    %73 = arith.cmpi slt, %3, %72 : vector<64x1xi32>
    %c8_i32_9 = arith.constant 8 : i32
    %74 = tpu.dynamic_rotate %37 by %c8_i32_9 dim 0 : vector<64x128xf32>, i32 -> vector<64x128xf32>
    %cst_10 = arith.constant 0.000000e+00 : f32
    %75 = vector.shape_cast %73 : vector<64x1xi1> to vector<64x1xi1>
    %76 = vector.broadcast %75 : vector<64x1xi1> to vector<64x128xi1>
    %77 = vector.broadcast %cst_10 : f32 to vector<64x128xf32>
    %78 = arith.select %76, %77, %74 : vector<64x128xi1>, vector<64x128xf32>
    %c56_i32 = arith.constant 56 : i32
    %79 = vector.broadcast %c56_i32 : i32 to vector<64x1xi32>
    %80 = arith.cmpi sge, %3, %79 : vector<64x1xi32>
    %c56_i32_11 = arith.constant 56 : i32
    %81 = tpu.dynamic_rotate %71 by %c56_i32_11 dim 0 : vector<64x128xf32>, i32 -> vector<64x128xf32>
    %cst_12 = arith.constant 0.000000e+00 : f32
    %82 = vector.shape_cast %80 : vector<64x1xi1> to vector<64x1xi1>
    %83 = vector.broadcast %82 : vector<64x1xi1> to vector<64x128xi1>
    %84 = vector.broadcast %cst_12 : f32 to vector<64x128xf32>
    %85 = arith.select %83, %84, %81 : vector<64x128xi1>, vector<64x128xf32>
    %86 = arith.addf %54, %78 : vector<64x128xf32>
    %87 = arith.addf %86, %85 : vector<64x128xf32>
    %88 = vector.shape_cast %20 : vector<128xf32> to vector<1x128xf32>
    %89 = vector.broadcast %88 : vector<1x128xf32> to vector<64x128xf32>
    %90 = arith.addf %87, %89 : vector<64x128xf32>
    %c0_13 = arith.constant 0 : index
    %c0_14 = arith.constant 0 : index
    %c0_15 = arith.constant 0 : index
    %91 = vector.load %arg6[%c0_13, %c0_14, %c0_15] : memref<1x64x128xf32, #tpu.memory_space<vmem>>, vector<1x64x128xf32>
    %92 = vector.shape_cast %91 : vector<1x64x128xf32> to vector<64x128xf32>
    %93 = vector.shape_cast %90 : vector<64x128xf32> to vector<1x64x128xf32>
    tpu.vector_store %arg6[%c0_13, %c0_14, %c0_15], %93 {strides = array<i32>} : memref<1x64x128xf32, #tpu.memory_space<vmem>>, vector<1x64x128xf32>,
    return
  }
  func.func @transform_0(%arg0: i32, %arg1: i32) -> (i32, i32, i32) {
    %c0_i32 = arith.constant 0 : i32
    %c0_i32_0 = arith.constant 0 : i32
    return %arg0, %c0_i32, %arg1 : i32, i32, i32
  }
  func.func @transform_1(%arg0: i32, %arg1: i32) -> (i32, i32) {
    %c0_i32 = arith.constant 0 : i32
    %c0_i32_0 = arith.constant 0 : i32
    return %c0_i32, %arg1 : i32, i32
  }
  func.func @transform_2(%arg0: i32, %arg1: i32) -> (i32, i32) {
    %c0_i32 = arith.constant 0 : i32
    %c0_i32_0 = arith.constant 0 : i32
    return %c0_i32, %arg1 : i32, i32
  }
  func.func @transform_3(%arg0: i32, %arg1: i32) -> (i32, i32) {
    %c0_i32 = arith.constant 0 : i32
    %c0_i32_0 = arith.constant 0 : i32
    %c0_i32_1 = arith.constant 0 : i32
    return %c0_i32, %c0_i32_0 : i32, i32
  }
  func.func @transform_4(%arg0: i32, %arg1: i32) -> (i32, i32, i32) {
    %c0_i32 = arith.constant 0 : i32
    %c0_i32_0 = arith.constant 0 : i32
    return %arg0, %c0_i32, %arg1 : i32, i32, i32
  }
}

</mosaic_0001>

<llo_original>
// kernel: tpu_custom_call.1
$region0: #{tpu_custom_call.1}
  #allocation0 [shape = 'u32[]', space=smem, size = 0x4, offset = 0x4, fixed_abs, tag = 'smem constant byte address 0x4 - core index']
  #allocation1 [shape = 'u32[144,128]{1,0:T(1,128)}', space=vmem, size = 0x12000, scoped, tag = 'internal scratch']
  %s0 = inlined_call_operand.hbm [shape: f32[2,64,256], index: 0, kind: input, shape index: {}]
  %s1 = inlined_call_operand.vmem [shape: f32[9,256], index: 1, kind: input, shape index: {}]
  %s2 = inlined_call_operand.vmem [shape: f32[1,256], index: 2, kind: input, shape index: {}]
  %s3 = inlined_call_operand.vmem [shape: s32[64,1], index: 3, kind: input, shape index: {}]
  %s4 = inlined_call_operand.hbm [shape: f32[2,64,256], index: 4, kind: output, shape index: {}]
  %s5 = sld [smem:[#allocation0]]
  $region91: #{tpu_custom_call.1} parent=0
    _
  %s7 = ssub.s32 1, %s5
  %s8 = scalar_select 0, %s7, %s5
  $region1: #{tpu_custom_call.1} parent=0
    #allocation2 [shape = 'u8[65536]{0}', space=vmem, size = 0x10000, scoped, tag = 'input window, operand 0']
    #allocation3 [shape = 's32[2]{0}', space=sflag, size = 0x8, scoped, tag = 'scoped memory for tpu_custom_call.1']
    #allocation4 [shape = 's32[2]{0}', space=sflag, size = 0x8, scoped, tag = 'scoped memory for tpu_custom_call.1']
    #allocation5 [shape = 'u8[16384]{0}', space=vmem, size = 0x4000, scoped, tag = 'input window, operand 1']
    #allocation6 [shape = 'u8[65536]{0}', space=vmem, size = 0x10000, scoped, tag = 'output window, operand 0']
    %9 = vsyncpa [#allocation3], 0
    %s10 = scalar_lea.sflag [#allocation3], 1
    %11 = vsyncpa %s10, 0
    %12 = vsyncpa [#allocation4], 0
    %s13 = scalar_lea.sflag [#allocation4], 1
    %14 = vsyncpa %s13, 0
    loop: start=0, step=1, limit=6
    $region2: #{tpu_custom_call.1} parent=1 // loop_pre_header
      _
    $region3: #{tpu_custom_call.1} parent=1 // loop_header
      %s16 = sphi 0, %s20
      %p17 = scmp.ge.s32.totalorder %s16, 6
      %s23 = sphi 0, %s35
      %s24 = sphi 0, %s31
      %s25 = sphi 0, %s23
      %s26 = sphi 0, %s24
      %s27 = sphi 0, %s25
      %s28 = sphi 0, %s26
      %s40 = sphi 0, %s42
      %s43 = sphi 0, %s40
      %s44 = sphi 0, %s43
      %s60 = sphi 0, %s44
      %s66 = sphi 0, %s68
      %s69 = sphi 0, %s66
      %s70 = sphi 0, %s69
      %s86 = sphi 0, %s70
      %s92 = sphi 0, %s94
      %s95 = sphi 0, %s92
      %s96 = sphi 0, %s95
      %s112 = sphi 0, %s96
      %s116 = sphi 0, %s116
      %s118 = sphi 0, %s116
      %s119 = sphi 0, %s118
      %s133 = sphi 0, %s119
      %s141 = sphi 0, %s143
      %s144 = sphi 0, %s141
      %s145 = sphi 0, %s144
      %s161 = sphi 0, %s145
    $region4: #{tpu_custom_call.1} parent=1 // loop_header_branch
      %19 = sbr.rel (%p17) target = $region8
    $region5: #{tpu_custom_call.1} parent=1 // loop_body
      %s21 = ssub.s32 %s16, 1
      %s22 = ssub.s32 %s16, 2
      %s29 = sadd.s32 1, %s24
      %p30 = scmp.ge.s32.totalorder %s29, 2
      %s31 = scalar_select %p30, 0, %s29
      %s32 = sadd.s32 1, %s23
      %s33 = scalar_select %p30, %s32, %s23
      %p34 = scmp.ge.s32.totalorder %s33, 2
      %s35 = scalar_select %p34, 0, %s33
      %s36 = ssub.s32 %s23, %s35
      %s37 = ssub.s32 %s24, %s31
      %s38 = sor.u32 %s36, %s37
      %p39 = scmp.eq.s32.totalorder %s38, 0
      %s41 = sadd.s32 %s40, 1
      %s42 = scalar_select %p39, %s40, %s41
      %p45 = pneg %p39
      %p46 = scmp.eq.s32.totalorder %s16, 3
      %p47 = por %p45, %p46
      %p48 = scmp.ne.s32.totalorder %s40, %s43
      %p49 = scmp.eq.s32.totalorder %s16, 0
      %p50 = por %p48, %p49
      %p51 = scmp.ne.s32.totalorder %s40, %s43
      %p52 = scmp.eq.s32.totalorder %s21, 3
      %p53 = por %p51, %p52
      %p54 = scmp.ne.s32.totalorder %s43, %s44
      %p55 = scmp.eq.s32.totalorder %s21, 0
      %p56 = por %p54, %p55
      %p57 = scmp.ne.s32.totalorder %s43, %s44
      %p58 = scmp.eq.s32.totalorder %s22, 3
      %p59 = por %p57, %p58
      %p61 = scmp.ne.s32.totalorder %s44, %s60
      %p62 = scmp.eq.s32.totalorder %s22, 0
      %p63 = por %p61, %p62
      %s64 = ssub.s32 %s24, %s31
      %p65 = scmp.eq.s32.totalorder %s64, 0
      %s67 = sadd.s32 %s66, 1
      %s68 = scalar_select %p65, %s66, %s67
      %p71 = pneg %p65
      %p72 = scmp.eq.s32.totalorder %s16, 3
      %p73 = por %p71, %p72
      %p74 = scmp.ne.s32.totalorder %s66, %s69
      %p75 = scmp.eq.s32.totalorder %s16, 0
      %p76 = por %p74, %p75
      %p77 = scmp.ne.s32.totalorder %s66, %s69
      %p78 = scmp.eq.s32.totalorder %s21, 3
      %p79 = por %p77, %p78
      %p80 = scmp.ne.s32.totalorder %s69, %s70
      %p81 = scmp.eq.s32.totalorder %s21, 0
      %p82 = por %p80, %p81
      %p83 = scmp.ne.s32.totalorder %s69, %s70
      %p84 = scmp.eq.s32.totalorder %s22, 3
      %p85 = por %p83, %p84
      %p87 = scmp.ne.s32.totalorder %s70, %s86
      %p88 = scmp.eq.s32.totalorder %s22, 0
      %p89 = por %p87, %p88
      %s90 = ssub.s32 %s24, %s31
      %p91 = scmp.eq.s32.totalorder %s90, 0
      %s93 = sadd.s32 %s92, 1
      %s94 = scalar_select %p91, %s92, %s93
      %p97 = pneg %p91
      %p98 = scmp.eq.s32.totalorder %s16, 3
      %p99 = por %p97, %p98
      %p100 = scmp.ne.s32.totalorder %s92, %s95
      %p101 = scmp.eq.s32.totalorder %s16, 0
      %p102 = por %p100, %p101
      %p103 = scmp.ne.s32.totalorder %s92, %s95
      %p104 = scmp.eq.s32.totalorder %s21, 3
      %p105 = por %p103, %p104
      %p106 = scmp.ne.s32.totalorder %s95, %s96
      %p107 = scmp.eq.s32.totalorder %s21, 0
      %p108 = por %p106, %p107
      %p109 = scmp.ne.s32.totalorder %s95, %s96
      %p110 = scmp.eq.s32.totalorder %s22, 3
      %p111 = por %p109, %p110
      %p113 = scmp.ne.s32.totalorder %s96, %s112
      %p114 = scmp.eq.s32.totalorder %s22, 0
      %p115 = por %p113, %p114
      %s117 = sadd.s32 %s116, 1
      %p120 = scmp.eq.s32.totalorder %s16, 3
      %p121 = scmp.ne.s32.totalorder %s116, %s118
      %p122 = scmp.eq.s32.totalorder %s16, 0
      %p123 = por %p121, %p122
      %p124 = scmp.ne.s32.totalorder %s116, %s118
      %p125 = scmp.eq.s32.totalorder %s21, 3
      %p126 = por %p124, %p125
      %p127 = scmp.ne.s32.totalorder %s118, %s119
      %p128 = scmp.eq.s32.totalorder %s21, 0
      %p129 = por %p127, %p128
      %p130 = scmp.ne.s32.totalorder %s118, %s119
      %p131 = scmp.eq.s32.totalorder %s22, 3
      %p132 = por %p130, %p131
      %p134 = scmp.ne.s32.totalorder %s119, %s133
      %p135 = scmp.eq.s32.totalorder %s22, 0
      %p136 = por %p134, %p135
      %s137 = ssub.s32 %s23, %s35
      %s138 = ssub.s32 %s24, %s31
      %s139 = sor.u32 %s137, %s138
      %p140 = scmp.eq.s32.totalorder %s139, 0
      %s142 = sadd.s32 %s141, 1
      %s143 = scalar_select %p140, %s141, %s142
      %p146 = pneg %p140
      %p147 = scmp.eq.s32.totalorder %s16, 3
      %p148 = por %p146, %p147
      %p149 = scmp.ne.s32.totalorder %s141, %s144
      %p150 = scmp.eq.s32.totalorder %s16, 0
      %p151 = por %p149, %p150
      %p152 = scmp.ne.s32.totalorder %s141, %s144
      %p153 = scmp.eq.s32.totalorder %s21, 3
      %p154 = por %p152, %p153
      %p155 = scmp.ne.s32.totalorder %s144, %s145
      %p156 = scmp.eq.s32.totalorder %s21, 0
      %p157 = por %p155, %p156
      %p158 = scmp.ne.s32.totalorder %s144, %s145
      %p159 = scmp.eq.s32.totalorder %s22, 3
      %p160 = por %p158, %p159
      %p162 = scmp.ne.s32.totalorder %s145, %s161
      %p163 = scmp.eq.s32.totalorder %s22, 0
      %p164 = por %p162, %p163
      %p165 = scmp.le.s32.totalorder 1, %s16
      %p166 = scmp.lt.s32.totalorder %s16, 5
      %p167 = pnand %p165, %p166
      %p168 = pneg %p167
      // Predicated region
      $region9: #{tpu_custom_call.1} parent=5 // pred_check
        _
      $region10: #{tpu_custom_call.1} parent=5 // pred_check_branch
        %170 = sbr.rel (%p167) target = $region12
      $region11: #{tpu_custom_call.1} parent=5 // pred_region
        %s171 = ssub.s32 %s16, 1
        // Predicated region
        $region13: #{tpu_custom_call.1} parent=11 // pred_check
          %p172 = pneg %p129
        $region14: #{tpu_custom_call.1} parent=11 // pred_check_branch
          %174 = sbr.rel (%p172) target = $region16
        $region15: #{tpu_custom_call.1} parent=11 // pred_region
          _
        $region16: #{tpu_custom_call.1} parent=11 // pred_fallthru
          _
      $region12: #{tpu_custom_call.1} parent=5 // pred_fallthru
        _
      %p175 = scmp.lt.s32.totalorder %s16, 4
      // Predicated region
      $region17: #{tpu_custom_call.1} parent=5 // pred_check
        %p176 = pneg %p175
      $region18: #{tpu_custom_call.1} parent=5 // pred_check_branch
        %178 = sbr.rel (%p176) target = $region20
      $region19: #{tpu_custom_call.1} parent=5 // pred_region
        // Predicated region
        $region21: #{tpu_custom_call.1} parent=19 // pred_check
          %p179 = pneg %p50
        $region22: #{tpu_custom_call.1} parent=19 // pred_check_branch
          %181 = sbr.rel (%p179) target = $region24
        $region23: #{tpu_custom_call.1} parent=19 // pred_region
          %s182 = sand.u32 %s40, 1
          %s183 = scalar_lea.sflag [#allocation3], %s182
          %s184 = sand.u32 %s40, 1
          %s185 = smul.addr %s184, 64
          %s186 = scalar_lea.vmem [#allocation2], %s185
          %s188 = ssub.s32 1024, 1024
          %189 = vsyncadd %s183, %s188
          %s190 = smul.addr %s23, 16
          %s191 = sadd.s32 %s24, %s190
          %s192 = smul.addr %s191, 128
          %s193 = scalar_lea.hbm %s0, %s192
          %s194 = sshll.u32 %s186, 4
          %s195 = int_to_ptr.vmem [resolvable:$true] %s194
          %200 = dma.hbm_to_vmem [thread:$0]  %s193, 1024, %s195, %s183, 256, 128, 8
        $region24: #{tpu_custom_call.1} parent=19 // pred_fallthru
          _
        // Predicated region
        $region25: #{tpu_custom_call.1} parent=19 // pred_check
          %p201 = pneg %p76
        $region26: #{tpu_custom_call.1} parent=19 // pred_check_branch
          %203 = sbr.rel (%p201) target = $region28
        $region27: #{tpu_custom_call.1} parent=19 // pred_region
          %s204 = sand.u32 %s66, 1
          %s205 = sand.u32 %s66, 1
          %s206 = smul.addr %s205, 16
          %s207 = scalar_lea.vmem [#allocation5], %s206
          %s208 = smul.addr %s24, 8
          %s209 = scalar_lea.vmem %s1, %s208
          // Predicated region
          $region29: #{tpu_custom_call.1} parent=27 // pred_check
            _
          $region30: #{tpu_custom_call.1} parent=27 // pred_check_branch
            %211 = sbr.rel (0) target = $region32
          $region31: #{tpu_custom_call.1} parent=27 // pred_region
            // Predicated region
            $region33: #{tpu_custom_call.1} parent=31 // pred_check
              _
            $region34: #{tpu_custom_call.1} parent=31 // pred_check_branch
              %213 = sbr.rel (0) target = $region36
            $region35: #{tpu_custom_call.1} parent=31 // pred_region
              // Predicated region
              $region48: #{tpu_custom_call.1} parent=35 // pred_check
                _
              $region49: #{tpu_custom_call.1} parent=35 // pred_check_branch
                %230 = sbr.rel (0) target = $region51
              $region50: #{tpu_custom_call.1} parent=35 // pred_region
                loop: start=0, step=1, limit=1
                $region52: #{tpu_custom_call.1} parent=50 // loop_pre_header
                  _
                $region53: #{tpu_custom_call.1} parent=50 // loop_header
                  %s232 = sphi 0, %s236
                  %p233 = scmp.ge.s32.totalorder %s232, 1
                  %s237 = sphi %s209, %s209
                  %s238 = sphi %s207, %s207
                $region54: #{tpu_custom_call.1} parent=50 // loop_header_branch
                  %235 = sbr.rel (%p233) target = $region58
                $region55: #{tpu_custom_call.1} parent=50 // loop_body
                  %v239 = vld [vmem:[%s237] sm:$0xff]
                  %240 = vst [vmem:[%s238] sm:$0xff] %v239
                  %v241 = vld [vmem:[%s237 + $0x10] sm:$0xff]
                  %242 = vst [vmem:[%s238 + $0x8] sm:$0xff] %v241
                $region56: #{tpu_custom_call.1} parent=50 // loop_footer
                  %s236 = sadd.s32 1, %s232
                $region57: #{tpu_custom_call.1} parent=50 // loop_footer_branch
                  %231 = sbr.rel target = $region53
                $region58: #{tpu_custom_call.1} parent=50 // loop_exit
                  _
              $region51: #{tpu_custom_call.1} parent=35 // pred_fallthru
                _
              // Predicated region
              $region59: #{tpu_custom_call.1} parent=35 // pred_check
                _
              $region60: #{tpu_custom_call.1} parent=35 // pred_check_branch
                %244 = sbr.rel target = $region62
              $region61: #{tpu_custom_call.1} parent=35 // pred_region
                _
              $region62: #{tpu_custom_call.1} parent=35 // pred_fallthru
                _
            $region36: #{tpu_custom_call.1} parent=31 // pred_fallthru
              _
            // Predicated region
            $region37: #{tpu_custom_call.1} parent=31 // pred_check
              _
            $region38: #{tpu_custom_call.1} parent=31 // pred_check_branch
              %215 = sbr.rel target = $region40
            $region39: #{tpu_custom_call.1} parent=31 // pred_region
              loop: start=0, step=1, limit=1
              $region41: #{tpu_custom_call.1} parent=39 // loop_pre_header
                _
              $region42: #{tpu_custom_call.1} parent=39 // loop_header
                %s218 = sphi 0, %s222
                %p219 = scmp.ge.s32.totalorder %s218, 1
                %s223 = sphi %s209, %s209
                %s224 = sphi %s207, %s207
              $region43: #{tpu_custom_call.1} parent=39 // loop_header_branch
                %221 = sbr.rel (%p219) target = $region47
              $region44: #{tpu_custom_call.1} parent=39 // loop_body
                %v225 = vld [vmem:[%s223] sm:$0xff]
                %226 = vst [vmem:[%s224] sm:$0xff] %v225
                %v227 = vld [vmem:[%s223 + $0x10] sm:$0xff]
                %228 = vst [vmem:[%s224 + $0x8] sm:$0xff] %v227
              $region45: #{tpu_custom_call.1} parent=39 // loop_footer
                %s222 = sadd.s32 1, %s218
              $region46: #{tpu_custom_call.1} parent=39 // loop_footer_branch
                %217 = sbr.rel target = $region42
              $region47: #{tpu_custom_call.1} parent=39 // loop_exit
                _
            $region40: #{tpu_custom_call.1} parent=31 // pred_fallthru
              _
          $region32: #{tpu_custom_call.1} parent=27 // pred_fallthru
            _
          %245 = vnop
        $region28: #{tpu_custom_call.1} parent=19 // pred_fallthru
          _
        // Predicated region
        $region63: #{tpu_custom_call.1} parent=19 // pred_check
          %p246 = pneg %p102
        $region64: #{tpu_custom_call.1} parent=19 // pred_check_branch
          %248 = sbr.rel (%p246) target = $region66
        $region65: #{tpu_custom_call.1} parent=19 // pred_region
          %p249 = scmp.lt.s32.totalorder %s24, 1
          %s250 = scalar_select %p249, %s24, 1
          %s251 = scalar_lea.vmem %s2, %s250
        $region66: #{tpu_custom_call.1} parent=19 // pred_fallthru
          _
      $region20: #{tpu_custom_call.1} parent=5 // pred_fallthru
        _
      %p252 = scmp.le.s32.totalorder 1, %s16
      %p253 = scmp.lt.s32.totalorder %s16, 5
      %p254 = pnand %p252, %p253
      %p255 = pneg %p254
      // Predicated region
      $region67: #{tpu_custom_call.1} parent=5 // pred_check
        _
      $region68: #{tpu_custom_call.1} parent=5 // pred_check_branch
        %257 = sbr.rel (%p254) target = $region70
      $region69: #{tpu_custom_call.1} parent=5 // pred_region
        %s258 = ssub.s32 %s16, 1
        %s259 = sand.u32 %s43, 1
        %s260 = scalar_lea.sflag [#allocation3], %s259
        %s261 = sand.u32 %s43, 1
        %s262 = smul.addr %s261, 64
        %s263 = scalar_lea.vmem [#allocation2], %s262
        // Predicated region
        $region71: #{tpu_custom_call.1} parent=69 // pred_check
          %p264 = pneg %p56
        $region72: #{tpu_custom_call.1} parent=69 // pred_check_branch
          %266 = sbr.rel (%p264) target = $region74
        $region73: #{tpu_custom_call.1} parent=69 // pred_region
          %267 = dma.done %s260, 1024
        $region74: #{tpu_custom_call.1} parent=69 // pred_fallthru
          _
        %s268 = sand.u32 %s69, 1
        %s269 = sand.u32 %s69, 1
        %s270 = smul.addr %s269, 16
        %s271 = scalar_lea.vmem [#allocation5], %s270
        // Predicated region
        $region75: #{tpu_custom_call.1} parent=69 // pred_check
          %p272 = pneg %p82
        $region76: #{tpu_custom_call.1} parent=69 // pred_check_branch
          %274 = sbr.rel (%p272) target = $region78
        $region77: #{tpu_custom_call.1} parent=69 // pred_region
          _
        $region78: #{tpu_custom_call.1} parent=69 // pred_fallthru
          _
        %s275 = sand.u32 %s43, 1
        %s276 = scalar_lea.sflag [#allocation3], %s275
        %s277 = sand.u32 %s43, 1
        %s278 = smul.addr %s277, 64
        %s279 = scalar_lea.vmem [#allocation2], %s278
        %p280 = pneg %p56
        %p281 = pneg %p53
        %s282 = sand.u32 %s69, 1
        %s283 = sand.u32 %s69, 1
        %s284 = smul.addr %s283, 16
        %s285 = scalar_lea.vmem [#allocation5], %s284
        %p286 = pneg %p82
        %p287 = pneg %p79
        %p288 = scmp.lt.s32.totalorder %s26, 1
        %s289 = scalar_select %p288, %s26, 1
        %s290 = scalar_lea.vmem %s2, %s289
        %p291 = pneg %p108
        %p292 = pneg %p105
        %p293 = pneg %p129
        %p294 = pneg %p126
        %p295 = pneg %p157
        %p296 = pneg %p154
        %s297 = sand.u32 %s144, 1
        %s298 = scalar_lea.sflag [#allocation4], %s297
        %s299 = sand.u32 %s144, 1
        %s300 = smul.addr %s299, 64
        %s301 = scalar_lea.vmem [#allocation6], %s300
        %p302 = scmp.lt.s32.totalorder %s26, 1
        %s303 = scalar_select %p302, %s26, 1
        %s304 = scalar_lea.vmem %s2, %s303
        %v305 = vld [vmem:[%s263] sm:$0xff]
        %v306 = vld [vmem:[%s263 + $0x8] sm:$0xff]
        %v307 = vld [vmem:[%s263 + $0x10] sm:$0xff]
        %v308 = vld [vmem:[%s263 + $0x18] sm:$0xff]
        %v309 = vld [vmem:[%s263 + $0x20] sm:$0xff]
        %v310 = vld [vmem:[%s263 + $0x28] sm:$0xff]
        %v311 = vld [vmem:[%s263 + $0x30] sm:$0xff]
        %v312 = vld [vmem:[%s263 + $0x38] sm:$0xff]
        %v313 = vld [vmem:[%s3] sm:$0xff]
        %v314 = vld [vmem:[%s3 + $0x8] sm:$0xff]
        %v315 = vld [vmem:[%s3 + $0x10] sm:$0xff]
        %v316 = vld [vmem:[%s3 + $0x18] sm:$0xff]
        %v317 = vld [vmem:[%s3 + $0x20] sm:$0xff]
        %v318 = vld [vmem:[%s3 + $0x28] sm:$0xff]
        %v319 = vld [vmem:[%s3 + $0x30] sm:$0xff]
        %v320 = vld [vmem:[%s3 + $0x38] sm:$0xff]
        %v321 = vlaneseq
        %v322 = vshrl.u32 %v321, 7
        %v323 = vadd.s32 %v322, 8
        %v324 = vadd.s32 %v322, 16
        %v325 = vadd.s32 %v322, 24
        %v326 = vadd.s32 %v322, 32
        %v327 = vadd.s32 %v322, 40
        %v328 = vadd.s32 %v322, 48
        %v329 = vadd.s32 %v322, 56
        %vm330 = vcmp.eq.s32.totalorder %v313, 0
        %vm331 = vcmp.eq.s32.totalorder %v314, 0
        %vm332 = vcmp.eq.s32.totalorder %v315, 0
        %vm333 = vcmp.eq.s32.totalorder %v316, 0
        %vm334 = vcmp.eq.s32.totalorder %v317, 0
        %vm335 = vcmp.eq.s32.totalorder %v318, 0
        %vm336 = vcmp.eq.s32.totalorder %v319, 0
        %vm337 = vcmp.eq.s32.totalorder %v320, 0
        %v338 = vrot.slane %v305, 7
        %v339 = vrot.slane %v306, 7
        %v340 = vrot.slane %v307, 7
        %v341 = vrot.slane %v308, 7
        %v342 = vrot.slane %v309, 7
        %v343 = vrot.slane %v310, 7
        %v344 = vrot.slane %v311, 7
        %v345 = vrot.slane %v312, 7
        %vm346 = vcmp.lt.s32.totalorder %v322, 1
        %v347 = vsel %vm346, %v344, %v345
        %v348 = vsel %vm346, %v343, %v344
        %v349 = vsel %vm346, %v342, %v343
        %v350 = vsel %vm346, %v341, %v342
        %v351 = vsel %vm346, %v340, %v341
        %v352 = vsel %vm346, %v339, %v340
        %v353 = vsel %vm346, %v338, %v339
        %v354 = vsel %vm346, %v345, %v338
        %v355 = vsel %vm330, 1, 0
        %v356 = vsel %vm331, 1, 0
        %v357 = vsel %vm332, 1, 0
        %v358 = vsel %vm333, 1, 0
        %v359 = vsel %vm334, 1, 0
        %v360 = vsel %vm335, 1, 0
        %v361 = vsel %vm336, 1, 0
        %v362 = vsel %vm337, 1, 0
        %363 = vset.pattern.permute.xlu0 0
        %364 = vperm.xlu0 %363, %v355
        %v365 = vpop.permute.xlu0 %364
        %366 = vset.pattern.permute.xlu0 0
        %367 = vperm.xlu0 %366, %v356
        %v368 = vpop.permute.xlu0 %367
        %369 = vset.pattern.permute.xlu0 0
        %370 = vperm.xlu0 %369, %v357
        %v371 = vpop.permute.xlu0 %370
        %372 = vset.pattern.permute.xlu0 0
        %373 = vperm.xlu0 %372, %v358
        %v374 = vpop.permute.xlu0 %373
        %375 = vset.pattern.permute.xlu0 0
        %376 = vperm.xlu0 %375, %v359
        %v377 = vpop.permute.xlu0 %376
        %378 = vset.pattern.permute.xlu0 0
        %379 = vperm.xlu0 %378, %v360
        %v380 = vpop.permute.xlu0 %379
        %381 = vset.pattern.permute.xlu0 0
        %382 = vperm.xlu0 %381, %v361
        %v383 = vpop.permute.xlu0 %382
        %384 = vset.pattern.permute.xlu0 0
        %385 = vperm.xlu0 %384, %v362
        %v386 = vpop.permute.xlu0 %385
        %vm387 = vcmp.eq.s32.totalorder %v365, 1
        %vm388 = vcmp.eq.s32.totalorder %v368, 1
        %vm389 = vcmp.eq.s32.totalorder %v371, 1
        %vm390 = vcmp.eq.s32.totalorder %v374, 1
        %vm391 = vcmp.eq.s32.totalorder %v377, 1
        %vm392 = vcmp.eq.s32.totalorder %v380, 1
        %vm393 = vcmp.eq.s32.totalorder %v383, 1
        %vm394 = vcmp.eq.s32.totalorder %v386, 1
        %v395 = vsel %vm387, 0.0, %v354
        %v396 = vsel %vm388, 0.0, %v353
        %v397 = vsel %vm389, 0.0, %v352
        %v398 = vsel %vm390, 0.0, %v351
        %v399 = vsel %vm391, 0.0, %v350
        %v400 = vsel %vm392, 0.0, %v349
        %v401 = vsel %vm393, 0.0, %v348
        %v402 = vsel %vm394, 0.0, %v347
        %vm403 = vcmp.eq.s32.totalorder %v313, 7
        %vm404 = vcmp.eq.s32.totalorder %v314, 7
        %vm405 = vcmp.eq.s32.totalorder %v315, 7
        %vm406 = vcmp.eq.s32.totalorder %v316, 7
        %vm407 = vcmp.eq.s32.totalorder %v317, 7
        %vm408 = vcmp.eq.s32.totalorder %v318, 7
        %vm409 = vcmp.eq.s32.totalorder %v319, 7
        %vm410 = vcmp.eq.s32.totalorder %v320, 7
        %v411 = vrot.slane %v305, 1
        %v412 = vrot.slane %v306, 1
        %v413 = vrot.slane %v307, 1
        %v414 = vrot.slane %v308, 1
        %v415 = vrot.slane %v309, 1
        %v416 = vrot.slane %v310, 1
        %v417 = vrot.slane %v311, 1
        %v418 = vrot.slane %v312, 1
        %vm419 = vcmp.lt.s32.totalorder %v322, 7
        %v420 = vsel %vm419, %v417, %v418
        %v421 = vsel %vm419, %v416, %v417
        %v422 = vsel %vm419, %v415, %v416
        %v423 = vsel %vm419, %v414, %v415
        %v424 = vsel %vm419, %v413, %v414
        %v425 = vsel %vm419, %v412, %v413
        %v426 = vsel %vm419, %v411, %v412
        %v427 = vsel %vm419, %v418, %v411
        %v428 = vsel %vm403, 1, 0
        %v429 = vsel %vm404, 1, 0
        %v430 = vsel %vm405, 1, 0
        %v431 = vsel %vm406, 1, 0
        %v432 = vsel %vm407, 1, 0
        %v433 = vsel %vm408, 1, 0
        %v434 = vsel %vm409, 1, 0
        %v435 = vsel %vm410, 1, 0
        %436 = vset.pattern.permute.xlu0 0
        %437 = vperm.xlu0 %436, %v428
        %v438 = vpop.permute.xlu0 %437
        %439 = vset.pattern.permute.xlu0 0
        %440 = vperm.xlu0 %439, %v429
        %v441 = vpop.permute.xlu0 %440
        %442 = vset.pattern.permute.xlu0 0
        %443 = vperm.xlu0 %442, %v430
        %v444 = vpop.permute.xlu0 %443
        %445 = vset.pattern.permute.xlu0 0
        %446 = vperm.xlu0 %445, %v431
        %v447 = vpop.permute.xlu0 %446
        %448 = vset.pattern.permute.xlu0 0
        %449 = vperm.xlu0 %448, %v432
        %v450 = vpop.permute.xlu0 %449
        %451 = vset.pattern.permute.xlu0 0
        %452 = vperm.xlu0 %451, %v433
        %v453 = vpop.permute.xlu0 %452
        %454 = vset.pattern.permute.xlu0 0
        %455 = vperm.xlu0 %454, %v434
        %v456 = vpop.permute.xlu0 %455
        %457 = vset.pattern.permute.xlu0 0
        %458 = vperm.xlu0 %457, %v435
        %v459 = vpop.permute.xlu0 %458
        %vm460 = vcmp.eq.s32.totalorder %v438, 1
        %vm461 = vcmp.eq.s32.totalorder %v441, 1
        %vm462 = vcmp.eq.s32.totalorder %v444, 1
        %vm463 = vcmp.eq.s32.totalorder %v447, 1
        %vm464 = vcmp.eq.s32.totalorder %v450, 1
        %vm465 = vcmp.eq.s32.totalorder %v453, 1
        %vm466 = vcmp.eq.s32.totalorder %v456, 1
        %vm467 = vcmp.eq.s32.totalorder %v459, 1
        %v468 = vsel %vm460, 0.0, %v426
        %v469 = vsel %vm461, 0.0, %v425
        %v470 = vsel %vm462, 0.0, %v424
        %v471 = vsel %vm463, 0.0, %v423
        %v472 = vsel %vm464, 0.0, %v422
        %v473 = vsel %vm465, 0.0, %v421
        %v474 = vsel %vm466, 0.0, %v420
        %v475 = vsel %vm467, 0.0, %v427
        %v476 = vld [vmem:[%s271] sm:$0xff]
        %v477 = vld [vmem:[%s271 + $0x8] sm:$0x1]
        %v478 = vld [vmem:[%s304] sm:$0x1]
        %v479 = vlaneseq
        %v480 = vshrl.u32 %v479, 7
        %v481 = vsub.s32 0, %v480
        %v482 = vrot.slane %v476, %v481
        %v483 = vmul.f32 %v395, %v482
        %v484 = vmul.f32 %v396, %v482
        %v485 = vmul.f32 %v397, %v482
        %v486 = vmul.f32 %v398, %v482
        %v487 = vmul.f32 %v399, %v482
        %v488 = vmul.f32 %v400, %v482
        %v489 = vmul.f32 %v401, %v482
        %v490 = vmul.f32 %v402, %v482
        %v491 = vlaneseq
        %v492 = vshrl.u32 %v491, 7
        %v493 = vsub.s32 1, %v492
        %v494 = vrot.slane %v476, %v493
        %v495 = vmul.f32 %v305, %v494
        %v496 = vmul.f32 %v306, %v494
        %v497 = vmul.f32 %v307, %v494
        %v498 = vmul.f32 %v308, %v494
        %v499 = vmul.f32 %v309, %v494
        %v500 = vmul.f32 %v310, %v494
        %v501 = vmul.f32 %v311, %v494
        %v502 = vmul.f32 %v312, %v494
        %v503 = vadd.f32 %v483, %v495
        %v504 = vadd.f32 %v484, %v496
        %v505 = vadd.f32 %v485, %v497
        %v506 = vadd.f32 %v486, %v498
        %v507 = vadd.f32 %v487, %v499
        %v508 = vadd.f32 %v488, %v500
        %v509 = vadd.f32 %v489, %v501
        %v510 = vadd.f32 %v490, %v502
        %v511 = vlaneseq
        %v512 = vshrl.u32 %v511, 7
        %v513 = vsub.s32 2, %v512
        %v514 = vrot.slane %v476, %v513
        %v515 = vmul.f32 %v468, %v514
        %v516 = vmul.f32 %v469, %v514
        %v517 = vmul.f32 %v470, %v514
        %v518 = vmul.f32 %v471, %v514
        %v519 = vmul.f32 %v472, %v514
        %v520 = vmul.f32 %v473, %v514
        %v521 = vmul.f32 %v474, %v514
        %v522 = vmul.f32 %v475, %v514
        %v523 = vadd.f32 %v503, %v515
        %v524 = vadd.f32 %v504, %v516
        %v525 = vadd.f32 %v505, %v517
        %v526 = vadd.f32 %v506, %v518
        %v527 = vadd.f32 %v507, %v519
        %v528 = vadd.f32 %v508, %v520
        %v529 = vadd.f32 %v509, %v521
        %v530 = vadd.f32 %v510, %v522
        %v531 = vlaneseq
        %v532 = vshrl.u32 %v531, 7
        %v533 = vsub.s32 3, %v532
        %v534 = vrot.slane %v476, %v533
        %v535 = vmul.f32 %v395, %v534
        %v536 = vmul.f32 %v396, %v534
        %v537 = vmul.f32 %v397, %v534
        %v538 = vmul.f32 %v398, %v534
        %v539 = vmul.f32 %v399, %v534
        %v540 = vmul.f32 %v400, %v534
        %v541 = vmul.f32 %v401, %v534
        %v542 = vmul.f32 %v402, %v534
        %v543 = vlaneseq
        %v544 = vshrl.u32 %v543, 7
        %v545 = vsub.s32 4, %v544
        %v546 = vrot.slane %v476, %v545
        %v547 = vmul.f32 %v305, %v546
        %v548 = vmul.f32 %v306, %v546
        %v549 = vmul.f32 %v307, %v546
        %v550 = vmul.f32 %v308, %v546
        %v551 = vmul.f32 %v309, %v546
        %v552 = vmul.f32 %v310, %v546
        %v553 = vmul.f32 %v311, %v546
        %v554 = vmul.f32 %v312, %v546
        %v555 = vadd.f32 %v535, %v547
        %v556 = vadd.f32 %v536, %v548
        %v557 = vadd.f32 %v537, %v549
        %v558 = vadd.f32 %v538, %v550
        %v559 = vadd.f32 %v539, %v551
        %v560 = vadd.f32 %v540, %v552
        %v561 = vadd.f32 %v541, %v553
        %v562 = vadd.f32 %v542, %v554
        %v563 = vlaneseq
        %v564 = vshrl.u32 %v563, 7
        %v565 = vsub.s32 5, %v564
        %v566 = vrot.slane %v476, %v565
        %v567 = vmul.f32 %v468, %v566
        %v568 = vmul.f32 %v469, %v566
        %v569 = vmul.f32 %v470, %v566
        %v570 = vmul.f32 %v471, %v566
        %v571 = vmul.f32 %v472, %v566
        %v572 = vmul.f32 %v473, %v566
        %v573 = vmul.f32 %v474, %v566
        %v574 = vmul.f32 %v475, %v566
        %v575 = vadd.f32 %v555, %v567
        %v576 = vadd.f32 %v556, %v568
        %v577 = vadd.f32 %v557, %v569
        %v578 = vadd.f32 %v558, %v570
        %v579 = vadd.f32 %v559, %v571
        %v580 = vadd.f32 %v560, %v572
        %v581 = vadd.f32 %v561, %v573
        %v582 = vadd.f32 %v562, %v574
        %v583 = vlaneseq
        %v584 = vshrl.u32 %v583, 7
        %v585 = vsub.s32 6, %v584
        %v586 = vrot.slane %v476, %v585
        %v587 = vmul.f32 %v395, %v586
        %v588 = vmul.f32 %v396, %v586
        %v589 = vmul.f32 %v397, %v586
        %v590 = vmul.f32 %v398, %v586
        %v591 = vmul.f32 %v399, %v586
        %v592 = vmul.f32 %v400, %v586
        %v593 = vmul.f32 %v401, %v586
        %v594 = vmul.f32 %v402, %v586
        %v595 = vlaneseq
        %v596 = vshrl.u32 %v595, 7
        %v597 = vsub.s32 7, %v596
        %v598 = vrot.slane %v476, %v597
        %v599 = vmul.f32 %v305, %v598
        %v600 = vmul.f32 %v306, %v598
        %v601 = vmul.f32 %v307, %v598
        %v602 = vmul.f32 %v308, %v598
        %v603 = vmul.f32 %v309, %v598
        %v604 = vmul.f32 %v310, %v598
        %v605 = vmul.f32 %v311, %v598
        %v606 = vmul.f32 %v312, %v598
        %v607 = vadd.f32 %v587, %v599
        %v608 = vadd.f32 %v588, %v600
        %v609 = vadd.f32 %v589, %v601
        %v610 = vadd.f32 %v590, %v602
        %v611 = vadd.f32 %v591, %v603
        %v612 = vadd.f32 %v592, %v604
        %v613 = vadd.f32 %v593, %v605
        %v614 = vadd.f32 %v594, %v606
        %v615 = vlaneseq
        %v616 = vshrl.u32 %v615, 7
        %v617 = vsub.s32 0, %v616
        %v618 = vrot.slane %v477, %v617
        %v619 = vmul.f32 %v468, %v618
        %v620 = vmul.f32 %v469, %v618
        %v621 = vmul.f32 %v470, %v618
        %v622 = vmul.f32 %v471, %v618
        %v623 = vmul.f32 %v472, %v618
        %v624 = vmul.f32 %v473, %v618
        %v625 = vmul.f32 %v474, %v618
        %v626 = vmul.f32 %v475, %v618
        %v627 = vadd.f32 %v607, %v619
        %v628 = vadd.f32 %v608, %v620
        %v629 = vadd.f32 %v609, %v621
        %v630 = vadd.f32 %v610, %v622
        %v631 = vadd.f32 %v611, %v623
        %v632 = vadd.f32 %v612, %v624
        %v633 = vadd.f32 %v613, %v625
        %v634 = vadd.f32 %v614, %v626
        %vm635 = vcmp.lt.s32.totalorder %v322, 8
        %vm636 = vcmp.lt.s32.totalorder %v323, 8
        %vm637 = vcmp.lt.s32.totalorder %v324, 8
        %vm638 = vcmp.lt.s32.totalorder %v325, 8
        %vm639 = vcmp.lt.s32.totalorder %v326, 8
        %vm640 = vcmp.lt.s32.totalorder %v327, 8
        %vm641 = vcmp.lt.s32.totalorder %v328, 8
        %vm642 = vcmp.lt.s32.totalorder %v329, 8
        %v643 = vsel %vm635, 1, 0
        %v644 = vsel %vm636, 1, 0
        %v645 = vsel %vm637, 1, 0
        %v646 = vsel %vm638, 1, 0
        %v647 = vsel %vm639, 1, 0
        %v648 = vsel %vm640, 1, 0
        %v649 = vsel %vm641, 1, 0
        %v650 = vsel %vm642, 1, 0
        %vm651 = vcmp.eq.s32.totalorder %v643, 1
        %vm652 = vcmp.eq.s32.totalorder %v644, 1
        %vm653 = vcmp.eq.s32.totalorder %v645, 1
        %vm654 = vcmp.eq.s32.totalorder %v646, 1
        %vm655 = vcmp.eq.s32.totalorder %v647, 1
        %vm656 = vcmp.eq.s32.totalorder %v648, 1
        %vm657 = vcmp.eq.s32.totalorder %v649, 1
        %vm658 = vcmp.eq.s32.totalorder %v650, 1
        %v659 = vsel %vm651, 0.0, %v530
        %v660 = vsel %vm652, 0.0, %v523
        %v661 = vsel %vm653, 0.0, %v524
        %v662 = vsel %vm654, 0.0, %v525
        %v663 = vsel %vm655, 0.0, %v526
        %v664 = vsel %vm656, 0.0, %v527
        %v665 = vsel %vm657, 0.0, %v528
        %v666 = vsel %vm658, 0.0, %v529
        %vm667 = vcmp.ge.s32.totalorder %v322, 56
        %vm668 = vcmp.ge.s32.totalorder %v323, 56
        %vm669 = vcmp.ge.s32.totalorder %v324, 56
        %vm670 = vcmp.ge.s32.totalorder %v325, 56
        %vm671 = vcmp.ge.s32.totalorder %v326, 56
        %vm672 = vcmp.ge.s32.totalorder %v327, 56
        %vm673 = vcmp.ge.s32.totalorder %v328, 56
        %vm674 = vcmp.ge.s32.totalorder %v329, 56
        %v675 = vsel %vm667, 1, 0
        %v676 = vsel %vm668, 1, 0
        %v677 = vsel %vm669, 1, 0
        %v678 = vsel %vm670, 1, 0
        %v679 = vsel %vm671, 1, 0
        %v680 = vsel %vm672, 1, 0
        %v681 = vsel %vm673, 1, 0
        %v682 = vsel %vm674, 1, 0
        %vm683 = vcmp.eq.s32.totalorder %v675, 1
        %vm684 = vcmp.eq.s32.totalorder %v676, 1
        %vm685 = vcmp.eq.s32.totalorder %v677, 1
        %vm686 = vcmp.eq.s32.totalorder %v678, 1
        %vm687 = vcmp.eq.s32.totalorder %v679, 1
        %vm688 = vcmp.eq.s32.totalorder %v680, 1
        %vm689 = vcmp.eq.s32.totalorder %v681, 1
        %vm690 = vcmp.eq.s32.totalorder %v682, 1
        %v691 = vsel %vm683, 0.0, %v628
        %v692 = vsel %vm684, 0.0, %v629
        %v693 = vsel %vm685, 0.0, %v630
        %v694 = vsel %vm686, 0.0, %v631
        %v695 = vsel %vm687, 0.0, %v632
        %v696 = vsel %vm688, 0.0, %v633
        %v697 = vsel %vm689, 0.0, %v634
        %v698 = vsel %vm690, 0.0, %v627
        %v699 = vadd.f32 %v575, %v659
        %v700 = vadd.f32 %v576, %v660
        %v701 = vadd.f32 %v577, %v661
        %v702 = vadd.f32 %v578, %v662
        %v703 = vadd.f32 %v579, %v663
        %v704 = vadd.f32 %v580, %v664
        %v705 = vadd.f32 %v581, %v665
        %v706 = vadd.f32 %v582, %v666
        %v707 = vadd.f32 %v699, %v691
        %v708 = vadd.f32 %v700, %v692
        %v709 = vadd.f32 %v701, %v693
        %v710 = vadd.f32 %v702, %v694
        %v711 = vadd.f32 %v703, %v695
        %v712 = vadd.f32 %v704, %v696
        %v713 = vadd.f32 %v705, %v697
        %v714 = vadd.f32 %v706, %v698
        %v716 = vlaneseq
        %v717 = vshrl.u32 %v716, 7
        %v718 = vsub.s32 0, %v717
        %v719 = vrot.slane %v478, %v718
        %v721 = vadd.f32 %v707, %v719
        %v722 = vadd.f32 %v708, %v719
        %v723 = vadd.f32 %v709, %v719
        %v724 = vadd.f32 %v710, %v719
        %v725 = vadd.f32 %v711, %v719
        %v726 = vadd.f32 %v712, %v719
        %v727 = vadd.f32 %v713, %v719
        %v728 = vadd.f32 %v714, %v719
        %729 = vst [vmem:[%s301] sm:$0xff] %v721
        %730 = vst [vmem:[%s301 + $0x8] sm:$0xff] %v722
        %731 = vst [vmem:[%s301 + $0x10] sm:$0xff] %v723
        %732 = vst [vmem:[%s301 + $0x18] sm:$0xff] %v724
        %733 = vst [vmem:[%s301 + $0x20] sm:$0xff] %v725
        %734 = vst [vmem:[%s301 + $0x28] sm:$0xff] %v726
        %735 = vst [vmem:[%s301 + $0x30] sm:$0xff] %v727
        %736 = vst [vmem:[%s301 + $0x38] sm:$0xff] %v728
        %s737 = sand.u32 %s144, 1
        %s738 = scalar_lea.sflag [#allocation4], %s737
        %s739 = sand.u32 %s144, 1
        %s740 = smul.addr %s739, 64
        %s741 = scalar_lea.vmem [#allocation6], %s740
        // Predicated region
        $region79: #{tpu_custom_call.1} parent=69 // pred_check
          %p742 = pneg %p154
        $region80: #{tpu_custom_call.1} parent=69 // pred_check_branch
          %744 = sbr.rel (%p742) target = $region82
        $region81: #{tpu_custom_call.1} parent=69 // pred_region
          %s746 = ssub.s32 1024, 1024
          %747 = vsyncadd %s738, %s746
          %s748 = smul.addr %s25, 16
          %s749 = sadd.s32 %s26, %s748
          %s750 = smul.addr %s749, 128
          %s751 = scalar_lea.hbm %s4, %s750
          %s752 = sshll.u32 %s741, 4
          %s753 = int_to_ptr.vmem [resolvable:$true] %s752
          %758 = dma.vmem_to_hbm [thread:$0]  %s753, 1024, %s751, %s738, 128, 256, 8
        $region82: #{tpu_custom_call.1} parent=69 // pred_fallthru
          _
      $region70: #{tpu_custom_call.1} parent=5 // pred_fallthru
        _
      %p759 = scmp.le.s32.totalorder 2, %s16
      // Predicated region
      $region83: #{tpu_custom_call.1} parent=5 // pred_check
        %p760 = pneg %p759
      $region84: #{tpu_custom_call.1} parent=5 // pred_check_branch
        %762 = sbr.rel (%p760) target = $region86
      $region85: #{tpu_custom_call.1} parent=5 // pred_region
        %s763 = ssub.s32 %s16, 2
        // Predicated region
        $region87: #{tpu_custom_call.1} parent=85 // pred_check
          %p764 = pneg %p160
        $region88: #{tpu_custom_call.1} parent=85 // pred_check_branch
          %766 = sbr.rel (%p764) target = $region90
        $region89: #{tpu_custom_call.1} parent=85 // pred_region
          %s767 = sand.u32 %s145, 1
          %s768 = scalar_lea.sflag [#allocation4], %s767
          %s769 = sand.u32 %s145, 1
          %s770 = smul.addr %s769, 64
          %s771 = scalar_lea.vmem [#allocation6], %s770
          %772 = dma.done %s768, 1024
        $region90: #{tpu_custom_call.1} parent=85 // pred_fallthru
          _
      $region86: #{tpu_custom_call.1} parent=5 // pred_fallthru
        _
    $region6: #{tpu_custom_call.1} parent=1 // loop_footer
      %s20 = sadd.s32 1, %s16
    $region7: #{tpu_custom_call.1} parent=1 // loop_footer_branch
      %15 = sbr.rel target = $region3
    $region8: #{tpu_custom_call.1} parent=1 // loop_exit
      _
    %773 = vsyncpa [#allocation3], 1
    %s774 = scalar_lea.sflag [#allocation3], 1
    %775 = vsyncpa %s774, 1
    %776 = vsyncpa [#allocation4], 1
    %s777 = scalar_lea.sflag [#allocation4], 1
    %778 = vsyncpa %s777, 1

</llo_original>
